<compile_context>
chip_gen: v6e
topology: v6e:2x2x1
jax: 0.10.0
libtpu: 0.0.40
codegen_flags: <defaults>
</compile_context>

<pallas_src>
import functools

import jax
import jax.numpy as jnp
from jax.experimental import pallas as pl
from jax.experimental.pallas import tpu as pltpu


def _round_up(x, m):
    return (x + m - 1) // m * m


def actor_critic_kernel(x_ref, w1_ref, b1_ref, w2_ref, b2_ref,
                        wh_ref, bh_ref, probs_ref, value_ref, *, action_dim):
    """One batch tile: backbone MLP -> fused (actor|critic) head -> softmax / value."""
    # MXU-operand cast per tile, hidden under the input DMA (no wrapper-side
    # full-array astype pass over `state`).
    x = x_ref[...].astype(w1_ref.dtype)                                 # (TB, S)

    # Backbone: Linear(S,64)+ReLU, Linear(64,64)+ReLU.
    # f32 accumulation on the MXU; bias add / ReLU stay f32 on the VPU.
    h1 = jnp.dot(x, w1_ref[...], preferred_element_type=jnp.float32) + b1_ref[...]
    h1 = jnp.maximum(h1, 0.0)
    h2 = jnp.dot(h1.astype(w2_ref.dtype), w2_ref[...],
                 preferred_element_type=jnp.float32) + b2_ref[...]
    feats = jnp.maximum(h2, 0.0)                                        # (TB, H) f32

    # Fused head: one lane-padded matmul.  Lanes [0, A) = actor logits,
    # lane A = critic value, lanes > A are zero padding.
    head = jnp.dot(feats.astype(wh_ref.dtype), wh_ref[...],
                   preferred_element_type=jnp.float32) + bh_ref[...]    # (TB, 128)

    lane = jax.lax.broadcasted_iota(jnp.int32, head.shape, dimension=1)
    is_logit = lane < action_dim

    # Numerically-stable softmax restricted to the actor lanes.  Exact divide:
    # rows must sum to 1 (PPO log-prob ratios); the approx reciprocal does not
    # guarantee that tightly enough.
    logits = jnp.where(is_logit, head, -jnp.inf)
    m = jnp.max(logits, axis=-1, keepdims=True)
    e = jnp.where(is_logit, jnp.exp(head - m), 0.0)
    denom = jnp.sum(e, axis=-1, keepdims=True)
    probs = e / denom

    # Two narrow outputs instead of a 128-lane f32 slab: ~14x less HBM
    # writeback at A=8 and no post-kernel slicing pass in the wrapper.
    probs_ref[...] = probs[:, :action_dim]
    value_ref[...] = head[:, action_dim:action_dim + 1]


def prepare_params(params, *, matmul_dtype=jnp.bfloat16):
    """Hoisted out of the forward pass (run once per parameter update):
    assembles the fused (actor|critic) head and casts weights to the MXU
    operand dtype.  Biases stay float32 (added post-accumulation)."""
    w1, b1, w2, b2, wa, ba, wc, bc = params
    H = w1.shape[1]
    A = wa.shape[1]
    HEAD = max(128, _round_up(A + 1, 128))
    w_head = (jnp.zeros((H, HEAD), jnp.float32)
              .at[:, :A].set(wa).at[:, A:A + 1].set(wc))
    b_head = (jnp.zeros((1, HEAD), jnp.float32)
              .at[:, :A].set(ba).at[:, A:A + 1].set(bc))
    return (w1.astype(matmul_dtype), b1,
            w2.astype(matmul_dtype), b2,
            w_head.astype(matmul_dtype), b_head)


@functools.partial(jax.jit, static_argnames=("action_dim", "tile_b"))
def actor_critic_forward(state, prepared, *, action_dim, tile_b=None):
    """state: (B, S) float32.  prepared: output of prepare_params().
    Returns (action_probs (B, action_dim), state_value (B, 1)), both float32."""
    w1, b1, w2, b2, w_head, b_head = prepared
    B, S = state.shape
    H = w1.shape[1]
    HEAD = w_head.shape[1]
    A = action_dim

    # Batch tiling.  Per-row work is tiny, so big tiles are needed to amortize
    # the ~0.35 us per-grid-step overhead; 2048 rows of f32 intermediates fit
    # comfortably under a 32 MiB scoped-VMEM limit on every generation.  For
    # large B use an even number (>=2) of "parallel" steps so v7x's two
    # TensorCores both get work.  16-row alignment keeps bf16 tiles packed.
    if tile_b is None:
        if B <= 2048:
            tile_b = _round_up(B, 16)
        else:
            n_steps = 2 * pl.cdiv(B, 2 * 2048)          # even, tiles <= 2048 rows
            tile_b = _round_up(pl.cdiv(B, n_steps), 16)

    # Ragged tail handled by Pallas' partial last block (masked writes) — no
    # wrapper-side jnp.pad pass over the batch.
    grid = (pl.cdiv(B, tile_b),)

    def rep(shape):
        # Grid-invariant whole-array block (weights / biases stay resident).
        return pl.BlockSpec(shape, lambda i: (0, 0))

    kernel = functools.partial(actor_critic_kernel, action_dim=A)

    probs, value = pl.pallas_call(
        kernel,
        out_shape=(jax.ShapeDtypeStruct((B, A), jnp.float32),
                   jax.ShapeDtypeStruct((B, 1), jnp.float32)),
        grid_spec=pltpu.PrefetchScalarGridSpec(
            num_scalar_prefetch=0,
            grid=grid,
            in_specs=[
                pl.BlockSpec((tile_b, S), lambda i: (i, 0)),   # state tile
                rep((S, H)), rep((1, H)),                      # backbone L1
                rep((H, H)), rep((1, H)),                      # backbone L2
                rep((H, HEAD)), rep((1, HEAD)),                # fused actor|critic
            ],
            out_specs=[
                pl.BlockSpec((tile_b, A), lambda i: (i, 0)),   # action probs
                pl.BlockSpec((tile_b, 1), lambda i: (i, 0)),   # state value
            ],
        ),
        compiler_params=pltpu.CompilerParams(
            dimension_semantics=("parallel",),
            vmem_limit_bytes=32 * 1024 * 1024,   # v5e default scoped VMEM is 16 MiB
        ),
    )(state, w1, b1, w2, b2, w_head, b_head)

    return probs, value


def init_params(key, state_dim, hidden, action_dim):
    """Deterministic init mimicking torch.nn.Linear (uniform +-1/sqrt(fan_in)).
    Weights are stored as (in, out)."""
    ks = jax.random.split(key, 8)

    def linear(kw, kb, fan_in, fan_out):
        bound = 1.0 / jnp.sqrt(jnp.float32(fan_in))
        w = jax.random.uniform(kw, (fan_in, fan_out), jnp.float32, -bound, bound)
        b = jax.random.uniform(kb, (1, fan_out), jnp.float32, -bound, bound)
        return w, b

    w1, b1 = linear(ks[0], ks[1], state_dim, hidden)    # backbone layer 1
    w2, b2 = linear(ks[2], ks[3], hidden, hidden)       # backbone layer 2
    wa, ba = linear(ks[4], ks[5], hidden, action_dim)   # actor
    wc, bc = linear(ks[6], ks[7], hidden, 1)            # critic
    return (w1, b1, w2, b2, wa, ba, wc, bc)


if __name__ == "__main__":
    key = jax.random.PRNGKey(0)
    k_state, k_params = jax.random.split(key)

    B, S, H, A = 16, 32, 64, 8          # batch, state_dim, hidden(=64), action_dim
    state = jax.random.normal(k_state, (B, S), dtype=jnp.float32)
    params = init_params(k_params, S, H, A)

    # bf16 MXU operands by default (f32 accumulation / elementwise in-kernel).
    prepared = prepare_params(params, matmul_dtype=jnp.bfloat16)
    probs, value = actor_critic_forward(state, prepared, action_dim=A)
    jax.block_until_ready((probs, value))

    # Shapes match the torch module; exact normalization -> rows sum to ~1.
    assert probs.shape == (B, A) and value.shape == (B, 1)
    assert jnp.allclose(jnp.sum(probs, axis=-1), 1.0, atol=1e-3)

    # Reference applying the same bf16 operand rounding with f32 accumulation,
    # mirroring the kernel's MXU math.
    w1, b1, w2, b2, wa, ba, wc, bc = params

    def mm(a, b):
        return jnp.dot(a.astype(jnp.bfloat16).astype(jnp.float32),
                       b.astype(jnp.bfloat16).astype(jnp.float32),
                       precision=jax.lax.Precision.HIGHEST)

    h1 = jnp.maximum(mm(state, w1) + b1, 0.0)
    feats = jnp.maximum(mm(h1, w2) + b2, 0.0)
    ref_probs = jax.nn.softmax(mm(feats, wa) + ba, axis=-1)
    ref_value = mm(feats, wc) + bc

    assert jnp.allclose(probs, ref_probs, atol=2e-3)
    assert jnp.allclose(value, ref_value, atol=2e-3)

    print("KERNEL_OK")
</pallas_src>

<mosaic_0001>
module attributes {stable_mosaic.version = 11 : i64} {
  func.func @actor_critic_kernel(%arg0: i32, %arg1: memref<16x32xf32, #tpu.memory_space<vmem>>, %arg2: memref<32x64xbf16, #tpu.memory_space<vmem>>, %arg3: memref<1x64xf32, #tpu.memory_space<vmem>>, %arg4: memref<64x64xbf16, #tpu.memory_space<vmem>>, %arg5: memref<1x64xf32, #tpu.memory_space<vmem>>, %arg6: memref<64x128xbf16, #tpu.memory_space<vmem>>, %arg7: memref<1x128xf32, #tpu.memory_space<vmem>>, %arg8: memref<16x8xf32, #tpu.memory_space<vmem>>, %arg9: memref<16x1xf32, #tpu.memory_space<vmem>>) attributes {dimension_semantics = [#tpu.dimension_semantics<parallel>], iteration_bounds = array<i64: 1>, scalar_prefetch = 0 : i64, scratch_operands = 0 : i64, tpu.core_type = #tpu.core_type<tc>, window_params = [{transform_indices = @transform_0, window_bounds = array<i64: 16, 32>}, {pipeline_mode = #tpu.pipeline_mode<synchronous>, transform_indices = @transform_1, window_bounds = array<i64: 32, 64>}, {pipeline_mode = #tpu.pipeline_mode<synchronous>, transform_indices = @transform_2, window_bounds = array<i64: 1, 64>}, {pipeline_mode = #tpu.pipeline_mode<synchronous>, transform_indices = @transform_3, window_bounds = array<i64: 64, 64>}, {pipeline_mode = #tpu.pipeline_mode<synchronous>, transform_indices = @transform_4, window_bounds = array<i64: 1, 64>}, {pipeline_mode = #tpu.pipeline_mode<synchronous>, transform_indices = @transform_5, window_bounds = array<i64: 64, 128>}, {pipeline_mode = #tpu.pipeline_mode<synchronous>, transform_indices = @transform_6, window_bounds = array<i64: 1, 128>}, {transform_indices = @transform_7, window_bounds = array<i64: 16, 8>}, {transform_indices = @transform_8, window_bounds = array<i64: 16, 1>}]} {
    %c0 = arith.constant 0 : index
    %c0_0 = arith.constant 0 : index
    %0 = vector.load %arg1[%c0, %c0_0] : memref<16x32xf32, #tpu.memory_space<vmem>>, vector<16x32xf32>
    %1 = arith.truncf %0 : vector<16x32xf32> to vector<16x32xbf16>
    %c0_1 = arith.constant 0 : index
    %c0_2 = arith.constant 0 : index
    %2 = vector.load %arg2[%c0_1, %c0_2] : memref<32x64xbf16, #tpu.memory_space<vmem>>, vector<32x64xbf16>
    %cst = arith.constant dense<0.000000e+00> : vector<16x64xf32>
    %3 = tpu.matmul %1, %2, %cst {dimension_numbers = #tpu.dot_dimension_numbers<[1], [0], [0], [1], [0, 0, 1, 1], [], []>} : vector<16x32xbf16>, vector<32x64xbf16>, vector<16x64xf32> -> vector<16x64xf32>
    %c0_3 = arith.constant 0 : index
    %c0_4 = arith.constant 0 : index
    %4 = vector.load %arg3[%c0_3, %c0_4] : memref<1x64xf32, #tpu.memory_space<vmem>>, vector<1x64xf32>
    %5 = vector.broadcast %4 : vector<1x64xf32> to vector<16x64xf32>
    %6 = arith.addf %3, %5 : vector<16x64xf32>
    %cst_5 = arith.constant 0.000000e+00 : f32
    %7 = vector.broadcast %cst_5 : f32 to vector<16x64xf32>
    %8 = arith.maximumf %6, %7 : vector<16x64xf32>
    %9 = arith.truncf %8 : vector<16x64xf32> to vector<16x64xbf16>
    %c0_6 = arith.constant 0 : index
    %c0_7 = arith.constant 0 : index
    %10 = vector.load %arg4[%c0_6, %c0_7] : memref<64x64xbf16, #tpu.memory_space<vmem>>, vector<64x64xbf16>
    %cst_8 = arith.constant dense<0.000000e+00> : vector<16x64xf32>
    %11 = tpu.matmul %9, %10, %cst_8 {dimension_numbers = #tpu.dot_dimension_numbers<[1], [0], [0], [1], [0, 0, 1, 1], [], []>} : vector<16x64xbf16>, vector<64x64xbf16>, vector<16x64xf32> -> vector<16x64xf32>
    %c0_9 = arith.constant 0 : index
    %c0_10 = arith.constant 0 : index
    %12 = vector.load %arg5[%c0_9, %c0_10] : memref<1x64xf32, #tpu.memory_space<vmem>>, vector<1x64xf32>
    %13 = vector.broadcast %12 : vector<1x64xf32> to vector<16x64xf32>
    %14 = arith.addf %11, %13 : vector<16x64xf32>
    %cst_11 = arith.constant 0.000000e+00 : f32
    %15 = vector.broadcast %cst_11 : f32 to vector<16x64xf32>
    %16 = arith.maximumf %14, %15 : vector<16x64xf32>
    %17 = arith.truncf %16 : vector<16x64xf32> to vector<16x64xbf16>
    %c0_12 = arith.constant 0 : index
    %c0_13 = arith.constant 0 : index
    %18 = vector.load %arg6[%c0_12, %c0_13] : memref<64x128xbf16, #tpu.memory_space<vmem>>, vector<64x128xbf16>
    %cst_14 = arith.constant dense<0.000000e+00> : vector<16x128xf32>
    %19 = tpu.matmul %17, %18, %cst_14 {dimension_numbers = #tpu.dot_dimension_numbers<[1], [0], [0], [1], [0, 0, 1, 1], [], []>} : vector<16x64xbf16>, vector<64x128xbf16>, vector<16x128xf32> -> vector<16x128xf32>
    %c0_15 = arith.constant 0 : index
    %c0_16 = arith.constant 0 : index
    %20 = vector.load %arg7[%c0_15, %c0_16] : memref<1x128xf32, #tpu.memory_space<vmem>>, vector<1x128xf32>
    %21 = vector.broadcast %20 : vector<1x128xf32> to vector<16x128xf32>
    %22 = arith.addf %19, %21 : vector<16x128xf32>
    %23 = tpu.iota {dimensions = array<i32: 1>} : vector<16x128xi32>
    %c8_i32 = arith.constant 8 : i32
    %24 = vector.broadcast %c8_i32 : i32 to vector<16x128xi32>
    %25 = arith.cmpi slt, %23, %24 : vector<16x128xi32>
    %cst_17 = arith.constant 0xFF800000 : f32
    %26 = vector.broadcast %cst_17 : f32 to vector<16x128xf32>
    %27 = arith.select %25, %22, %26 : vector<16x128xi1>, vector<16x128xf32>
    %cst_18 = arith.constant dense<0xFF800000> : vector<16xf32>
    %28 = vector.multi_reduction <maximumf>, %27, %cst_18 [1] : vector<16x128xf32> to vector<16xf32>
    %29 = vector.shape_cast %28 : vector<16xf32> to vector<16x1xf32>
    %30 = vector.broadcast %29 : vector<16x1xf32> to vector<16x128xf32>
    %31 = arith.subf %22, %30 : vector<16x128xf32>
    %32 = math.exp %31 : vector<16x128xf32>
    %cst_19 = arith.constant 0.000000e+00 : f32
    %33 = vector.broadcast %cst_19 : f32 to vector<16x128xf32>
    %34 = arith.select %25, %32, %33 : vector<16x128xi1>, vector<16x128xf32>
    %cst_20 = arith.constant dense<0.000000e+00> : vector<16xf32>
    %35 = vector.multi_reduction <add>, %34, %cst_20 [1] : vector<16x128xf32> to vector<16xf32>
    %36 = vector.shape_cast %35 : vector<16xf32> to vector<16x1xf32>
    %37 = vector.broadcast %36 : vector<16x1xf32> to vector<16x128xf32>
    %38 = arith.divf %34, %37 : vector<16x128xf32>
    %39 = vector.extract_strided_slice %38 {offsets = [0, 0], sizes = [16, 8], strides = [1, 1]} : vector<16x128xf32> to vector<16x8xf32>
    %c0_21 = arith.constant 0 : index
    %c0_22 = arith.constant 0 : index
    %40 = vector.load %arg8[%c0_21, %c0_22] : memref<16x8xf32, #tpu.memory_space<vmem>>, vector<16x8xf32>
    tpu.vector_store %arg8[%c0_21, %c0_22], %39 {strides = array<i32>} : memref<16x8xf32, #tpu.memory_space<vmem>>, vector<16x8xf32>,
    %41 = vector.extract_strided_slice %22 {offsets = [0, 8], sizes = [16, 1], strides = [1, 1]} : vector<16x128xf32> to vector<16x1xf32>
    %c0_23 = arith.constant 0 : index
    %c0_24 = arith.constant 0 : index
    %42 = vector.load %arg9[%c0_23, %c0_24] : memref<16x1xf32, #tpu.memory_space<vmem>>, vector<16x1xf32>
    tpu.vector_store %arg9[%c0_23, %c0_24], %41 {strides = array<i32>} : memref<16x1xf32, #tpu.memory_space<vmem>>, vector<16x1xf32>,
    return
  }
  func.func @transform_0(%arg0: i32) -> (i32, i32) {
    %c0_i32 = arith.constant 0 : i32
    %c0_i32_0 = arith.constant 0 : i32
    return %arg0, %c0_i32 : i32, i32
  }
  func.func @transform_1(%arg0: i32) -> (i32, i32) {
    %c0_i32 = arith.constant 0 : i32
    %c0_i32_0 = arith.constant 0 : i32
    %c0_i32_1 = arith.constant 0 : i32
    return %c0_i32, %c0_i32_0 : i32, i32
  }
  func.func @transform_2(%arg0: i32) -> (i32, i32) {
    %c0_i32 = arith.constant 0 : i32
    %c0_i32_0 = arith.constant 0 : i32
    %c0_i32_1 = arith.constant 0 : i32
    return %c0_i32, %c0_i32_0 : i32, i32
  }
  func.func @transform_3(%arg0: i32) -> (i32, i32) {
    %c0_i32 = arith.constant 0 : i32
    %c0_i32_0 = arith.constant 0 : i32
    %c0_i32_1 = arith.constant 0 : i32
    return %c0_i32, %c0_i32_0 : i32, i32
  }
  func.func @transform_4(%arg0: i32) -> (i32, i32) {
    %c0_i32 = arith.constant 0 : i32
    %c0_i32_0 = arith.constant 0 : i32
    %c0_i32_1 = arith.constant 0 : i32
    return %c0_i32, %c0_i32_0 : i32, i32
  }
  func.func @transform_5(%arg0: i32) -> (i32, i32) {
    %c0_i32 = arith.constant 0 : i32
    %c0_i32_0 = arith.constant 0 : i32
    %c0_i32_1 = arith.constant 0 : i32
    return %c0_i32, %c0_i32_0 : i32, i32
  }
  func.func @transform_6(%arg0: i32) -> (i32, i32) {
    %c0_i32 = arith.constant 0 : i32
    %c0_i32_0 = arith.constant 0 : i32
    %c0_i32_1 = arith.constant 0 : i32
    return %c0_i32, %c0_i32_0 : i32, i32
  }
  func.func @transform_7(%arg0: i32) -> (i32, i32) {
    %c0_i32 = arith.constant 0 : i32
    %c0_i32_0 = arith.constant 0 : i32
    return %arg0, %c0_i32 : i32, i32
  }
  func.func @transform_8(%arg0: i32) -> (i32, i32) {
    %c0_i32 = arith.constant 0 : i32
    %c0_i32_0 = arith.constant 0 : i32
    return %arg0, %c0_i32 : i32, i32
  }
}

</mosaic_0001>

<llo_original>
// kernel: actor_critic_forward.1
$region0: #{actor_critic_forward.1}
  #allocation0 [shape = 'u32[]', space=smem, size = 0x4, offset = 0x4, fixed_abs, tag = 'smem constant byte address 0x4 - core index']
  #allocation1 [shape = 'u32[144,128]{1,0:T(1,128)}', space=vmem, size = 0x12000, scoped, tag = 'internal scratch']
  %s0 = inlined_call_operand.hbm [shape: f32[16,32], index: 0, kind: input, shape index: {}]
  %s1 = inlined_call_operand.hbm [shape: bf16[32,64], index: 1, kind: input, shape index: {}]
  %s2 = inlined_call_operand.vmem [shape: f32[1,64], index: 2, kind: input, shape index: {}]
  %s3 = inlined_call_operand.hbm [shape: bf16[64,64], index: 3, kind: input, shape index: {}]
  %s4 = inlined_call_operand.vmem [shape: f32[1,64], index: 4, kind: input, shape index: {}]
  %s5 = inlined_call_operand.hbm [shape: bf16[64,128], index: 5, kind: input, shape index: {}]
  %s6 = inlined_call_operand.vmem [shape: f32[1,128], index: 6, kind: input, shape index: {}]
  %s7 = inlined_call_operand.vmem [shape: f32[16,8], index: 7, kind: output, shape index: {0}]
  %s8 = inlined_call_operand.vmem [shape: f32[16,1], index: 8, kind: output, shape index: {1}]
  %9 = xla_tuple %s7, %s8
  %s10 = sld [smem:[#allocation0]]
  $region62: #{actor_critic_forward.1} parent=0
    _
  %s12 = ssub.s32 1, %s10
  %s13 = scalar_select 0, %s12, %s10
  $region1: #{actor_critic_forward.1} parent=0
    #allocation2 [shape = 'u8[8192]{0}', space=vmem, size = 0x2000, scoped, tag = 'input window, operand 0, single buffered']
    #allocation3 [shape = 's32[1]{0}', space=sflag, size = 0x4, scoped, tag = 'scoped memory for actor_critic_forward.1']
    #allocation4 [shape = 'u8[8192]{0}', space=vmem, size = 0x2000, scoped, tag = 'input window, operand 1, single buffered']
    #allocation5 [shape = 's32[1]{0}', space=sflag, size = 0x4, scoped, tag = 'scoped memory for actor_critic_forward.1']
    #allocation6 [shape = 'u8[16384]{0}', space=vmem, size = 0x4000, scoped, tag = 'input window, operand 3, single buffered']
    #allocation7 [shape = 'u8[16384]{0}', space=vmem, size = 0x4000, scoped, tag = 'input window, operand 5, single buffered']
    #allocation8 [shape = 's32[1]{0}', space=sflag, size = 0x4, scoped, tag = 'scoped memory for actor_critic_forward.1']
    %14 = vsyncpa [#allocation3], 0
    %15 = vsyncpa [#allocation5], 0
    %16 = vsyncpa [#allocation8], 0
    // Predicated region
    $region2: #{actor_critic_forward.1} parent=1 // pred_check
      _
    $region3: #{actor_critic_forward.1} parent=1 // pred_check_branch
      %18 = sbr.rel (0) target = $region5
    $region4: #{actor_critic_forward.1} parent=1 // pred_region
      %s20 = ssub.s32 256, 256
      %21 = vsyncadd [#allocation3], %s20
      %s22 = sshll.u32 [#allocation2], 4
      %s23 = int_to_ptr.vmem [resolvable:$true] %s22
      %28 = dma.hbm_to_vmem [thread:$0]  %s0, 256, %s23, [#allocation3], 128, 128, 8
    $region5: #{actor_critic_forward.1} parent=1 // pred_fallthru
      _
    // Predicated region
    $region6: #{actor_critic_forward.1} parent=1 // pred_check
      _
    $region7: #{actor_critic_forward.1} parent=1 // pred_check_branch
      %30 = sbr.rel (0) target = $region9
    $region8: #{actor_critic_forward.1} parent=1 // pred_region
      %s32 = ssub.s32 256, 256
      %33 = vsyncadd [#allocation5], %s32
      %s34 = sshll.u32 [#allocation4], 4
      %s35 = int_to_ptr.vmem [resolvable:$true] %s34
      %40 = dma.hbm_to_vmem [thread:$0]  %s1, 256, %s35, [#allocation5], 64, 64, 4
    $region9: #{actor_critic_forward.1} parent=1 // pred_fallthru
      _
    // Predicated region
    $region10: #{actor_critic_forward.1} parent=1 // pred_check
      _
    $region11: #{actor_critic_forward.1} parent=1 // pred_check_branch
      %42 = sbr.rel (0) target = $region13
    $region12: #{actor_critic_forward.1} parent=1 // pred_region
      _
    $region13: #{actor_critic_forward.1} parent=1 // pred_fallthru
      _
    // Predicated region
    $region14: #{actor_critic_forward.1} parent=1 // pred_check
      _
    $region15: #{actor_critic_forward.1} parent=1 // pred_check_branch
      %44 = sbr.rel (0) target = $region17
    $region16: #{actor_critic_forward.1} parent=1 // pred_region
      %s46 = ssub.s32 512, 512
      %47 = vsyncadd [#allocation5], %s46
      %s48 = sshll.u32 [#allocation6], 4
      %s49 = int_to_ptr.vmem [resolvable:$true] %s48
      %54 = dma.hbm_to_vmem [thread:$0]  %s3, 512, %s49, [#allocation5], 64, 64, 4
    $region17: #{actor_critic_forward.1} parent=1 // pred_fallthru
      _
    // Predicated region
    $region18: #{actor_critic_forward.1} parent=1 // pred_check
      _
    $region19: #{actor_critic_forward.1} parent=1 // pred_check_branch
      %56 = sbr.rel (0) target = $region21
    $region20: #{actor_critic_forward.1} parent=1 // pred_region
      _
    $region21: #{actor_critic_forward.1} parent=1 // pred_fallthru
      _
    // Predicated region
    $region22: #{actor_critic_forward.1} parent=1 // pred_check
      _
    $region23: #{actor_critic_forward.1} parent=1 // pred_check_branch
      %58 = sbr.rel (0) target = $region25
    $region24: #{actor_critic_forward.1} parent=1 // pred_region
      %s60 = ssub.s32 512, 512
      %61 = vsyncadd [#allocation8], %s60
      %s62 = sshll.u32 [#allocation7], 4
      %s63 = int_to_ptr.vmem [resolvable:$true] %s62
      %68 = dma.hbm_to_vmem [thread:$0]  %s5, 512, %s63, [#allocation8], 64, 64, 4
    $region25: #{actor_critic_forward.1} parent=1 // pred_fallthru
      _
    // Predicated region
    $region26: #{actor_critic_forward.1} parent=1 // pred_check
      _
    $region27: #{actor_critic_forward.1} parent=1 // pred_check_branch
      %70 = sbr.rel (0) target = $region29
    $region28: #{actor_critic_forward.1} parent=1 // pred_region
      _
    $region29: #{actor_critic_forward.1} parent=1 // pred_fallthru
      _
    // Predicated region
    $region30: #{actor_critic_forward.1} parent=1 // pred_check
      _
    $region31: #{actor_critic_forward.1} parent=1 // pred_check_branch
      %72 = sbr.rel (0) target = $region33
    $region32: #{actor_critic_forward.1} parent=1 // pred_region
      %73 = dma.done [#allocation3], 256
    $region33: #{actor_critic_forward.1} parent=1 // pred_fallthru
      _
    // Predicated region
    $region34: #{actor_critic_forward.1} parent=1 // pred_check
      _
    $region35: #{actor_critic_forward.1} parent=1 // pred_check_branch
      %75 = sbr.rel (0) target = $region37
    $region36: #{actor_critic_forward.1} parent=1 // pred_region
      %76 = dma.done [#allocation5], 256
    $region37: #{actor_critic_forward.1} parent=1 // pred_fallthru
      _
    // Predicated region
    $region38: #{actor_critic_forward.1} parent=1 // pred_check
      _
    $region39: #{actor_critic_forward.1} parent=1 // pred_check_branch
      %78 = sbr.rel (0) target = $region41
    $region40: #{actor_critic_forward.1} parent=1 // pred_region
      %79 = dma.done [#allocation5], 512
    $region41: #{actor_critic_forward.1} parent=1 // pred_fallthru
      _
    // Predicated region
    $region42: #{actor_critic_forward.1} parent=1 // pred_check
      _
    $region43: #{actor_critic_forward.1} parent=1 // pred_check_branch
      %81 = sbr.rel (0) target = $region45
    $region44: #{actor_critic_forward.1} parent=1 // pred_region
      %82 = dma.done [#allocation8], 512
    $region45: #{actor_critic_forward.1} parent=1 // pred_fallthru
      _
    %v84 = vld [vmem:[#allocation2] sm:$0xff]
    %v85 = vld [vmem:[#allocation2 + $0x8] sm:$0xff]
    %v86 = vpack.c.bf16 %v85, %v84
    %v87 = vld [vmem:[#allocation4] sm:$0xf]
    %v88 = vld [vmem:[#allocation4 + $0x4] sm:$0xf]
    %v89 = vld [vmem:[#allocation4 + $0x8] sm:$0xf]
    %v90 = vld [vmem:[#allocation4 + $0xc] sm:$0xf]
    %v91 = vld [vmem:[%s2] sm:$0x1]
    %v93 = vlaneseq
    %v94 = vshrl.u32 %v93, 7
    %v95 = vsub.s32 0, %v94
    %v96 = vrot.slane %v91, %v95
    %v102 = vunpack.c.l.b16 %v87
    %v103 = vunpack.c.l.b16 %v88
    %v104 = vunpack.c.l.b16 %v89
    %v105 = vunpack.c.l.b16 %v90
    %v106 = vpack.c.b16 %v103, %v102
    %v107 = vpack.c.b16 %v105, %v104
    %vm110 = vcmask 261120
    %v112 = vsel %vm110, %v86, 0
    %114 = vmatprep.subr.bf16.mxu0 0
    %115 = vmatpush1.bf16.msra.mxu0 0
    %116 = vmatprep.subr.bf16.mxu0 0
    %117 = vmatpush1.bf16.msra.mxu0 0
    %118 = vmatprep.subr.bf16.mxu0 0
    %119 = vmatpush1.bf16.msra.mxu0 0
    %120 = vmatprep.subr.bf16.mxu0 0
    %121 = vmatpush1.bf16.msra.mxu0 0
    %122 = vmatprep.subr.bf16.mxu0 0
    %123 = vmatpush1.bf16.msra.mxu0 0
    %124 = vmatprep.subr.bf16.mxu0 0
    %125 = vmatpush1.bf16.msra.mxu0 0
    %126 = vmatprep.subr.bf16.mxu0 0
    %127 = vmatpush1.bf16.msra.mxu0 %v107
    %128 = vmatprep.subr.bf16.mxu0 0
    %129 = vmatpush1.bf16.msra.mxu0 %v106
    %130 = vmatprep.subr.bf16.mxu0 0
    %131 = vmatpush2.bf16.msra.mxu0 0
    %132 = vmatprep.subr.bf16.mxu0 0
    %133 = vmatpush2.bf16.msra.mxu0 0
    %134 = vmatprep.subr.bf16.mxu0 0
    %135 = vmatpush2.bf16.msra.mxu0 0
    %136 = vmatprep.subr.bf16.mxu0 0
    %137 = vmatpush2.bf16.msra.mxu0 0
    %138 = vmatprep.subr.bf16.mxu0 0
    %139 = vmatpush2.bf16.msra.mxu0 0
    %140 = vmatprep.subr.bf16.mxu0 0
    %141 = vmatpush2.bf16.msra.mxu0 0
    %142 = vmatprep.subr.bf16.mxu0 0
    %143 = vmatpush2.bf16.msra.mxu0 0
    %144 = vmatprep.subr.bf16.mxu0 0
    %145 = vmatpush2.bf16.msra.mxu0 0
    %146 = vmatprep.mubr.bf16.mxu0 0
    %147 = vmatmul.mubr.bf16.gmra.mxu0 %v112
    %v148 = vpop.f32.mrf.mxu0
    %v149 = vadd.f32 %v96, %v148
    %v150 = vpop.f32.mrf.mxu0
    %v151 = vpop.f32.mrf.mxu0
    %v152 = vadd.f32 %v96, %v151
    %v153 = vpop.f32.mrf.mxu0
    %154 = vdwg.mxu0
    %v155 = vmax.f32 %v149, 0.0
    %v156 = vmax.f32 %v152, 0.0
    %v157 = vpack.c.bf16 %v156, %v155
    %v158 = vld [vmem:[#allocation6] sm:$0xf]
    %v159 = vld [vmem:[#allocation6 + $0x4] sm:$0xf]
    %v160 = vld [vmem:[#allocation6 + $0x8] sm:$0xf]
    %v161 = vld [vmem:[#allocation6 + $0xc] sm:$0xf]
    %v162 = vld [vmem:[#allocation6 + $0x10] sm:$0xf]
    %v163 = vld [vmem:[#allocation6 + $0x14] sm:$0xf]
    %v164 = vld [vmem:[#allocation6 + $0x18] sm:$0xf]
    %v165 = vld [vmem:[#allocation6 + $0x1c] sm:$0xf]
    %v166 = vld [vmem:[%s4] sm:$0x1]
    %v168 = vlaneseq
    %v169 = vshrl.u32 %v168, 7
    %v170 = vsub.s32 0, %v169
    %v171 = vrot.slane %v166, %v170
    %v181 = vunpack.c.l.b16 %v158
    %v182 = vunpack.c.l.b16 %v159
    %v183 = vunpack.c.l.b16 %v160
    %v184 = vunpack.c.l.b16 %v161
    %v185 = vunpack.c.l.b16 %v162
    %v186 = vunpack.c.l.b16 %v163
    %v187 = vunpack.c.l.b16 %v164
    %v188 = vunpack.c.l.b16 %v165
    %v189 = vpack.c.b16 %v182, %v181
    %v190 = vpack.c.b16 %v184, %v183
    %v191 = vpack.c.b16 %v186, %v185
    %v192 = vpack.c.b16 %v188, %v187
    %vm197 = vcmask 523264
    %v199 = vsel %vm197, %v157, 0
    %201 = vmatprep.subr.bf16.mxu0 0
    %202 = vmatpush1.bf16.msra.mxu0 0
    %203 = vmatprep.subr.bf16.mxu0 0
    %204 = vmatpush1.bf16.msra.mxu0 0
    %205 = vmatprep.subr.bf16.mxu0 0
    %206 = vmatpush1.bf16.msra.mxu0 0
    %207 = vmatprep.subr.bf16.mxu0 0
    %208 = vmatpush1.bf16.msra.mxu0 0
    %209 = vmatprep.subr.bf16.mxu0 0
    %210 = vmatpush1.bf16.msra.mxu0 %v192
    %211 = vmatprep.subr.bf16.mxu0 0
    %212 = vmatpush1.bf16.msra.mxu0 %v191
    %213 = vmatprep.subr.bf16.mxu0 0
    %214 = vmatpush1.bf16.msra.mxu0 %v190
    %215 = vmatprep.subr.bf16.mxu0 0
    %216 = vmatpush1.bf16.msra.mxu0 %v189
    %217 = vmatprep.subr.bf16.mxu0 0
    %218 = vmatpush2.bf16.msra.mxu0 0
    %219 = vmatprep.subr.bf16.mxu0 0
    %220 = vmatpush2.bf16.msra.mxu0 0
    %221 = vmatprep.subr.bf16.mxu0 0
    %222 = vmatpush2.bf16.msra.mxu0 0
    %223 = vmatprep.subr.bf16.mxu0 0
    %224 = vmatpush2.bf16.msra.mxu0 0
    %225 = vmatprep.subr.bf16.mxu0 0
    %226 = vmatpush2.bf16.msra.mxu0 0
    %227 = vmatprep.subr.bf16.mxu0 0
    %228 = vmatpush2.bf16.msra.mxu0 0
    %229 = vmatprep.subr.bf16.mxu0 0
    %230 = vmatpush2.bf16.msra.mxu0 0
    %231 = vmatprep.subr.bf16.mxu0 0
    %232 = vmatpush2.bf16.msra.mxu0 0
    %233 = vmatprep.mubr.bf16.mxu0 0
    %234 = vmatmul.mubr.bf16.gmra.mxu0 %v199
    %v235 = vpop.f32.mrf.mxu0
    %v236 = vadd.f32 %v171, %v235
    %v237 = vpop.f32.mrf.mxu0
    %v238 = vpop.f32.mrf.mxu0
    %v239 = vadd.f32 %v171, %v238
    %v240 = vpop.f32.mrf.mxu0
    %241 = vdwg.mxu0
    %v242 = vmax.f32 %v236, 0.0
    %v243 = vmax.f32 %v239, 0.0
    %v244 = vpack.c.bf16 %v243, %v242
    %v245 = vld [vmem:[#allocation7] sm:$0xf]
    %v246 = vld [vmem:[#allocation7 + $0x4] sm:$0xf]
    %v247 = vld [vmem:[#allocation7 + $0x8] sm:$0xf]
    %v248 = vld [vmem:[#allocation7 + $0xc] sm:$0xf]
    %v249 = vld [vmem:[#allocation7 + $0x10] sm:$0xf]
    %v250 = vld [vmem:[#allocation7 + $0x14] sm:$0xf]
    %v251 = vld [vmem:[#allocation7 + $0x18] sm:$0xf]
    %v252 = vld [vmem:[#allocation7 + $0x1c] sm:$0xf]
    %v253 = vld [vmem:[%s6] sm:$0x1]
    %v255 = vlaneseq
    %v256 = vshrl.u32 %v255, 7
    %v257 = vsub.s32 0, %v256
    %v258 = vrot.slane %v253, %v257
    %v268 = vunpack.c.l.b16 %v245
    %v269 = vunpack.c.l.b16 %v246
    %v270 = vunpack.c.l.b16 %v247
    %v271 = vunpack.c.l.b16 %v248
    %v272 = vunpack.c.l.b16 %v249
    %v273 = vunpack.c.l.b16 %v250
    %v274 = vunpack.c.l.b16 %v251
    %v275 = vunpack.c.l.b16 %v252
    %v276 = vpack.c.b16 %v269, %v268
    %v277 = vpack.c.b16 %v271, %v270
    %v278 = vpack.c.b16 %v273, %v272
    %v279 = vpack.c.b16 %v275, %v274
    %v285 = vsel %vm197, %v244, 0
    %287 = vmatprep.subr.bf16.mxu0 0
    %288 = vmatpush1.bf16.msra.mxu0 0
    %289 = vmatprep.subr.bf16.mxu0 0
    %290 = vmatpush1.bf16.msra.mxu0 0
    %291 = vmatprep.subr.bf16.mxu0 0
    %292 = vmatpush1.bf16.msra.mxu0 0
    %293 = vmatprep.subr.bf16.mxu0 0
    %294 = vmatpush1.bf16.msra.mxu0 0
    %295 = vmatprep.subr.bf16.mxu0 0
    %296 = vmatpush1.bf16.msra.mxu0 %v279
    %297 = vmatprep.subr.bf16.mxu0 0
    %298 = vmatpush1.bf16.msra.mxu0 %v278
    %299 = vmatprep.subr.bf16.mxu0 0
    %300 = vmatpush1.bf16.msra.mxu0 %v277
    %301 = vmatprep.subr.bf16.mxu0 0
    %302 = vmatpush1.bf16.msra.mxu0 %v276
    %303 = vmatprep.subr.bf16.mxu0 0
    %304 = vmatpush2.bf16.msra.mxu0 0
    %305 = vmatprep.subr.bf16.mxu0 0
    %306 = vmatpush2.bf16.msra.mxu0 0
    %307 = vmatprep.subr.bf16.mxu0 0
    %308 = vmatpush2.bf16.msra.mxu0 0
    %309 = vmatprep.subr.bf16.mxu0 0
    %310 = vmatpush2.bf16.msra.mxu0 0
    %311 = vmatprep.subr.bf16.mxu0 0
    %312 = vmatpush2.bf16.msra.mxu0 0
    %313 = vmatprep.subr.bf16.mxu0 0
    %314 = vmatpush2.bf16.msra.mxu0 0
    %315 = vmatprep.subr.bf16.mxu0 0
    %316 = vmatpush2.bf16.msra.mxu0 0
    %317 = vmatprep.subr.bf16.mxu0 0
    %318 = vmatpush2.bf16.msra.mxu0 0
    %319 = vmatprep.mubr.bf16.mxu0 0
    %320 = vmatmul.mubr.bf16.gmra.mxu0 %v285
    %v321 = vpop.f32.mrf.mxu0
    %v322 = vadd.f32 %v258, %v321
    %v323 = vpop.f32.mrf.mxu0
    %v324 = vpop.f32.mrf.mxu0
    %v325 = vadd.f32 %v258, %v324
    %v326 = vpop.f32.mrf.mxu0
    %327 = vdwg.mxu0
    %v328 = vlaneseq
    %v329 = vand.u32 %v328, 127
    %vm330 = vcmp.lt.s32.totalorder %v329, 8
    %v331 = vsel %vm330, %v322, -inf
    %v332 = vsel %vm330, %v325, -inf
    %333 = vmax.xlane.f32.xlu0 %v331
    %v334 = vpop.xlane.xlu0 %333
    %335 = vmax.xlane.f32.xlu0 %v332
    %v336 = vpop.xlane.xlu0 %335
    %v337 = vsub.f32 %v322, %v334
    %v338 = vsub.f32 %v325, %v336
    %v339 = vmul.f32 %v337, 1.442695
    %v340 = vpow.pop %v339
    %v341 = vmul.f32 %v338, 1.442695
    %v342 = vpow.pop %v341
    %v343 = vsel %vm330, %v340, 0.0
    %v344 = vsel %vm330, %v342, 0.0
    %345 = vadd.xlane.f32.xlu0 %v343
    %v346 = vpop.xlane.xlu0 %345
    %347 = vadd.xlane.f32.xlu0 %v344
    %v348 = vpop.xlane.xlu0 %347
    %v349 = vrcp.pop %v346
    %v350 = vmul.f32 %v343, %v349
    %v351 = vrcp.pop %v348
    %v352 = vmul.f32 %v344, %v351
    %vm353 = vcmask 64512
    %354 = vst.msk [vmem:[%s7] sm:$0xff] %vm353, %v350
    %355 = vst.msk [vmem:[%s7 + $0x8] sm:$0xff] %vm353, %v352
    %358 = vrot.lane.b32.xlu0 %v322, 120
    %v359 = vpop.permute.xlu0 %358
    %360 = vrot.lane.b32.xlu0 %v325, 120
    %v361 = vpop.permute.xlu0 %360
    %vm364 = vcmask 7168
    %365 = vst.msk [vmem:[%s8] sm:$0xff] %vm364, %v359
    %366 = vst.msk [vmem:[%s8 + $0x8] sm:$0xff] %vm364, %v361
    // Predicated region
    $region46: #{actor_critic_forward.1} parent=1 // pred_check
      _
    $region47: #{actor_critic_forward.1} parent=1 // pred_check_branch
      %368 = sbr.rel (0) target = $region49
    $region48: #{actor_critic_forward.1} parent=1 // pred_region
      _
    $region49: #{actor_critic_forward.1} parent=1 // pred_fallthru
      _
    // Predicated region
    $region50: #{actor_critic_forward.1} parent=1 // pred_check
      _
    $region51: #{actor_critic_forward.1} parent=1 // pred_check_branch
      %370 = sbr.rel (0) target = $region53
    $region52: #{actor_critic_forward.1} parent=1 // pred_region
      _
    $region53: #{actor_critic_forward.1} parent=1 // pred_fallthru
      _
    // Predicated region
    $region54: #{actor_critic_forward.1} parent=1 // pred_check
      _
    $region55: #{actor_critic_forward.1} parent=1 // pred_check_branch
      %372 = sbr.rel (0) target = $region57
    $region56: #{actor_critic_forward.1} parent=1 // pred_region
      _
    $region57: #{actor_critic_forward.1} parent=1 // pred_fallthru
      _
    // Predicated region
    $region58: #{actor_critic_forward.1} parent=1 // pred_check
      _
    $region59: #{actor_critic_forward.1} parent=1 // pred_check_branch
      %374 = sbr.rel (0) target = $region61
    $region60: #{actor_critic_forward.1} parent=1 // pred_region
      _
    $region61: #{actor_critic_forward.1} parent=1 // pred_fallthru
      _
    %375 = vsyncpa [#allocation3], 1
    %376 = vsyncpa [#allocation5], 1
    %377 = vsyncpa [#allocation8], 1

</llo_original>
